<compile_context>
chip_gen: v5e
topology: v5e:2x2
jax: 0.10.0
libtpu: 0.0.40
codegen_flags: <defaults>
</compile_context>

<pallas_src>
import functools

import jax
import jax.numpy as jnp
from jax.experimental import pallas as pl
from jax.experimental.pallas import tpu as pltpu


def _spectral_mix_kernel(x_ref, w_ref, o_ref, *, cin):
    """Complex per-mode channel mixing for one batch element.

    x_ref: (1, 2, cin, L)    re/im of the retained Fourier modes
    w_ref: (2, cin, cout, L) re/im of the (concatenated) spectral weights
    o_ref: (1, 2, cout, L)   re/im of the mixed modes
    """
    cout = o_ref.shape[2]
    L = o_ref.shape[3]

    xr = x_ref[0, 0, :, :]                      # (cin, L) f32
    xi = x_ref[0, 1, :, :]                      # (cin, L) f32

    acc_re = jnp.zeros((cout, L), jnp.float32)
    acc_im = jnp.zeros((cout, L), jnp.float32)

    # Contraction over input channels: each step is a few lane-dense VPU
    # multiply-adds on (cout, L) tiles.  Avoids a (cin, cout, L) intermediate.
    for i in range(cin):
        xr_i = xr[i:i + 1, :]                   # (1, L), broadcasts over sublanes
        xi_i = xi[i:i + 1, :]
        wr_i = w_ref[0, i, :, :]                # (cout, L)
        wi_i = w_ref[1, i, :, :]
        acc_re = acc_re + xr_i * wr_i - xi_i * wi_i
        acc_im = acc_im + xr_i * wi_i + xi_i * wr_i

    o_ref[0, 0, :, :] = acc_re.astype(o_ref.dtype)
    o_ref[0, 1, :, :] = acc_im.astype(o_ref.dtype)


def spectral_conv2d_forward(x, weights1, weights2, *, modes1, modes2):
    """SpectralConv2d.forward.

    x:              (B, Cin, H, W) float32
    weights1/2:     (Cin, Cout, modes1, modes2, 2) float32 (last axis = re/im)
    returns:        (B, Cout, H, W) float32
    """
    b, cin, hh, ww = x.shape
    cout = weights1.shape[1]
    wf = ww // 2 + 1
    L = 2 * modes1 * modes2

    # ---- forward FFT (plain JAX; no FFT primitive inside Pallas) ----
    x_ft = jnp.fft.rfft2(x)                                     # (B, Cin, H, Wf) c64

    # Gather the two retained corners and flatten modes into the lane axis.
    x_low = x_ft[:, :, :modes1, :modes2]
    x_high = x_ft[:, :, hh - modes1:, :modes2]
    x_c = jnp.concatenate([x_low, x_high], axis=2)              # (B, Cin, 2*m1, m2)
    x_c = x_c.reshape(b, cin, L)
    x_ri = jnp.stack([jnp.real(x_c), jnp.imag(x_c)], axis=1)    # (B, 2, Cin, L) f32

    # Weights: same corner concatenation; split re/im into a leading axis.
    w_c = jnp.concatenate([weights1, weights2], axis=2)         # (Cin, Cout, 2*m1, m2, 2)
    w_c = w_c.reshape(cin, cout, L, 2)
    w_ri = jnp.stack([w_c[..., 0], w_c[..., 1]], axis=0)        # (2, Cin, Cout, L) f32

    kernel = functools.partial(_spectral_mix_kernel, cin=cin)

    flops = int(8 * b * cin * cout * L)                         # 4 mul + 4 add per complex MAC
    bytes_accessed = int(4 * (x_ri.size + w_ri.size + b * 2 * cout * L))

    out = pl.pallas_call(
        kernel,
        out_shape=jax.ShapeDtypeStruct((b, 2, cout, L), jnp.float32),
        grid_spec=pltpu.PrefetchScalarGridSpec(
            num_scalar_prefetch=0,
            grid=(b,),
            in_specs=[
                pl.BlockSpec((1, 2, cin, L), lambda bi: (bi, 0, 0, 0)),     # x modes
                pl.BlockSpec((2, cin, cout, L), lambda bi: (0, 0, 0, 0)),   # weights (resident)
            ],
            out_specs=pl.BlockSpec((1, 2, cout, L), lambda bi: (bi, 0, 0, 0)),
        ),
        compiler_params=pltpu.CompilerParams(
            dimension_semantics=("parallel",)),
        cost_estimate=pl.CostEstimate(
            flops=flops, transcendentals=0, bytes_accessed=bytes_accessed),
    )(x_ri, w_ri)

    # Scatter mixed corners into the zero spectrum and inverse FFT (plain JAX).
    out_c = (out[:, 0] + 1j * out[:, 1]).reshape(b, cout, 2 * modes1, modes2)
    out_ft = jnp.zeros((b, cout, hh, wf), jnp.complex64)
    out_ft = out_ft.at[:, :, :modes1, :modes2].set(out_c[:, :, :modes1])
    out_ft = out_ft.at[:, :, hh - modes1:, :modes2].set(out_c[:, :, modes1:])
    # TODO(synk): rfft2/irfft2 have no Pallas equivalent; they stay as XLA ops.
    return jnp.fft.irfft2(out_ft, s=(hh, ww))


def init_params(key, in_channels, out_channels, modes1, modes2):
    """Matches SpectralConv2d.__init__: scale * U[0,1) weights, last dim = re/im."""
    scale = 1.0 / (in_channels * out_channels)
    k1, k2 = jax.random.split(key)
    shape = (in_channels, out_channels, modes1, modes2, 2)
    w1 = scale * jax.random.uniform(k1, shape, jnp.float32)
    w2 = scale * jax.random.uniform(k2, shape, jnp.float32)
    return w1, w2


def _reference_forward(x, w1, w2, *, modes1, modes2):
    """Pure-JAX reference of SpectralConv2d.forward."""
    b, cin, hh, ww = x.shape
    cout = w1.shape[1]
    x_ft = jnp.fft.rfft2(x)
    w1c = w1[..., 0] + 1j * w1[..., 1]
    w2c = w2[..., 0] + 1j * w2[..., 1]
    out_ft = jnp.zeros((b, cout, hh, ww // 2 + 1), jnp.complex64)
    out_ft = out_ft.at[:, :, :modes1, :modes2].set(
        jnp.einsum("bixy,ioxy->boxy", x_ft[:, :, :modes1, :modes2], w1c))
    out_ft = out_ft.at[:, :, hh - modes1:, :modes2].set(
        jnp.einsum("bixy,ioxy->boxy", x_ft[:, :, hh - modes1:, :modes2], w2c))
    return jnp.fft.irfft2(out_ft, s=(hh, ww))


if __name__ == "__main__":
    # Small shapes consistent with the module: NCHW input, modes <= H/2.
    B, CIN, COUT, H, W = 2, 4, 4, 16, 16
    MODES1, MODES2 = 4, 4

    key = jax.random.PRNGKey(0)
    kx, kw = jax.random.split(key)
    x = jax.random.normal(kx, (B, CIN, H, W), jnp.float32)
    w1, w2 = init_params(kw, CIN, COUT, MODES1, MODES2)

    out = spectral_conv2d_forward(x, w1, w2, modes1=MODES1, modes2=MODES2)
    out = jax.block_until_ready(out)

    ref = _reference_forward(x, w1, w2, modes1=MODES1, modes2=MODES2)
    assert out.shape == (B, COUT, H, W)
    assert jnp.allclose(out, ref, atol=1e-4, rtol=1e-4)

    print("KERNEL_OK")
</pallas_src>

<mosaic_0001>
module attributes {stable_mosaic.version = 11 : i64} {
  func.func @_spectral_mix_kernel(%arg0: i32, %arg1: memref<1x2x4x32xf32, #tpu.memory_space<vmem>>, %arg2: memref<2x4x4x32xf32, #tpu.memory_space<vmem>>, %arg3: memref<1x2x4x32xf32, #tpu.memory_space<vmem>>) attributes {dimension_semantics = [#tpu.dimension_semantics<parallel>], iteration_bounds = array<i64: 2>, scalar_prefetch = 0 : i64, scratch_operands = 0 : i64, tpu.core_type = #tpu.core_type<tc>, window_params = [{transform_indices = @transform_0, window_bounds = array<i64: 1, 2, 4, 32>}, {pipeline_mode = #tpu.pipeline_mode<synchronous>, transform_indices = @transform_1, window_bounds = array<i64: 2, 4, 4, 32>}, {transform_indices = @transform_2, window_bounds = array<i64: 1, 2, 4, 32>}]} {
    %c0 = arith.constant 0 : index
    %c0_0 = arith.constant 0 : index
    %c0_1 = arith.constant 0 : index
    %c0_2 = arith.constant 0 : index
    %0 = vector.load %arg1[%c0, %c0_0, %c0_1, %c0_2] : memref<1x2x4x32xf32, #tpu.memory_space<vmem>>, vector<1x1x4x32xf32>
    %1 = vector.shape_cast %0 : vector<1x1x4x32xf32> to vector<4x32xf32>
    %c0_3 = arith.constant 0 : index
    %c1 = arith.constant 1 : index
    %c0_4 = arith.constant 0 : index
    %c0_5 = arith.constant 0 : index
    %2 = vector.load %arg1[%c0_3, %c1, %c0_4, %c0_5] : memref<1x2x4x32xf32, #tpu.memory_space<vmem>>, vector<1x1x4x32xf32>
    %3 = vector.shape_cast %2 : vector<1x1x4x32xf32> to vector<4x32xf32>
    %cst = arith.constant 0.000000e+00 : f32
    %4 = vector.broadcast %cst : f32 to vector<4x32xf32>
    %cst_6 = arith.constant 0.000000e+00 : f32
    %5 = vector.broadcast %cst_6 : f32 to vector<4x32xf32>
    %6 = vector.extract_strided_slice %1 {offsets = [0, 0], sizes = [1, 32], strides = [1, 1]} : vector<4x32xf32> to vector<1x32xf32>
    %7 = vector.extract_strided_slice %3 {offsets = [0, 0], sizes = [1, 32], strides = [1, 1]} : vector<4x32xf32> to vector<1x32xf32>
    %c0_7 = arith.constant 0 : index
    %c0_8 = arith.constant 0 : index
    %c0_9 = arith.constant 0 : index
    %c0_10 = arith.constant 0 : index
    %8 = vector.load %arg2[%c0_7, %c0_8, %c0_9, %c0_10] : memref<2x4x4x32xf32, #tpu.memory_space<vmem>>, vector<1x1x4x32xf32>
    %9 = vector.shape_cast %8 : vector<1x1x4x32xf32> to vector<4x32xf32>
    %c1_11 = arith.constant 1 : index
    %c0_12 = arith.constant 0 : index
    %c0_13 = arith.constant 0 : index
    %c0_14 = arith.constant 0 : index
    %10 = vector.load %arg2[%c1_11, %c0_12, %c0_13, %c0_14] : memref<2x4x4x32xf32, #tpu.memory_space<vmem>>, vector<1x1x4x32xf32>
    %11 = vector.shape_cast %10 : vector<1x1x4x32xf32> to vector<4x32xf32>
    %12 = vector.broadcast %6 : vector<1x32xf32> to vector<4x32xf32>
    %13 = arith.mulf %12, %9 : vector<4x32xf32>
    %14 = arith.addf %4, %13 : vector<4x32xf32>
    %15 = vector.broadcast %7 : vector<1x32xf32> to vector<4x32xf32>
    %16 = arith.mulf %15, %11 : vector<4x32xf32>
    %17 = arith.subf %14, %16 : vector<4x32xf32>
    %18 = vector.broadcast %6 : vector<1x32xf32> to vector<4x32xf32>
    %19 = arith.mulf %18, %11 : vector<4x32xf32>
    %20 = arith.addf %5, %19 : vector<4x32xf32>
    %21 = vector.broadcast %7 : vector<1x32xf32> to vector<4x32xf32>
    %22 = arith.mulf %21, %9 : vector<4x32xf32>
    %23 = arith.addf %20, %22 : vector<4x32xf32>
    %24 = vector.extract_strided_slice %1 {offsets = [1, 0], sizes = [1, 32], strides = [1, 1]} : vector<4x32xf32> to vector<1x32xf32>
    %25 = vector.extract_strided_slice %3 {offsets = [1, 0], sizes = [1, 32], strides = [1, 1]} : vector<4x32xf32> to vector<1x32xf32>
    %c0_15 = arith.constant 0 : index
    %c1_16 = arith.constant 1 : index
    %c0_17 = arith.constant 0 : index
    %c0_18 = arith.constant 0 : index
    %26 = vector.load %arg2[%c0_15, %c1_16, %c0_17, %c0_18] : memref<2x4x4x32xf32, #tpu.memory_space<vmem>>, vector<1x1x4x32xf32>
    %27 = vector.shape_cast %26 : vector<1x1x4x32xf32> to vector<4x32xf32>
    %c1_19 = arith.constant 1 : index
    %c1_20 = arith.constant 1 : index
    %c0_21 = arith.constant 0 : index
    %c0_22 = arith.constant 0 : index
    %28 = vector.load %arg2[%c1_19, %c1_20, %c0_21, %c0_22] : memref<2x4x4x32xf32, #tpu.memory_space<vmem>>, vector<1x1x4x32xf32>
    %29 = vector.shape_cast %28 : vector<1x1x4x32xf32> to vector<4x32xf32>
    %30 = vector.broadcast %24 : vector<1x32xf32> to vector<4x32xf32>
    %31 = arith.mulf %30, %27 : vector<4x32xf32>
    %32 = arith.addf %17, %31 : vector<4x32xf32>
    %33 = vector.broadcast %25 : vector<1x32xf32> to vector<4x32xf32>
    %34 = arith.mulf %33, %29 : vector<4x32xf32>
    %35 = arith.subf %32, %34 : vector<4x32xf32>
    %36 = vector.broadcast %24 : vector<1x32xf32> to vector<4x32xf32>
    %37 = arith.mulf %36, %29 : vector<4x32xf32>
    %38 = arith.addf %23, %37 : vector<4x32xf32>
    %39 = vector.broadcast %25 : vector<1x32xf32> to vector<4x32xf32>
    %40 = arith.mulf %39, %27 : vector<4x32xf32>
    %41 = arith.addf %38, %40 : vector<4x32xf32>
    %42 = vector.extract_strided_slice %1 {offsets = [2, 0], sizes = [1, 32], strides = [1, 1]} : vector<4x32xf32> to vector<1x32xf32>
    %43 = vector.extract_strided_slice %3 {offsets = [2, 0], sizes = [1, 32], strides = [1, 1]} : vector<4x32xf32> to vector<1x32xf32>
    %c0_23 = arith.constant 0 : index
    %c2 = arith.constant 2 : index
    %c0_24 = arith.constant 0 : index
    %c0_25 = arith.constant 0 : index
    %44 = vector.load %arg2[%c0_23, %c2, %c0_24, %c0_25] : memref<2x4x4x32xf32, #tpu.memory_space<vmem>>, vector<1x1x4x32xf32>
    %45 = vector.shape_cast %44 : vector<1x1x4x32xf32> to vector<4x32xf32>
    %c1_26 = arith.constant 1 : index
    %c2_27 = arith.constant 2 : index
    %c0_28 = arith.constant 0 : index
    %c0_29 = arith.constant 0 : index
    %46 = vector.load %arg2[%c1_26, %c2_27, %c0_28, %c0_29] : memref<2x4x4x32xf32, #tpu.memory_space<vmem>>, vector<1x1x4x32xf32>
    %47 = vector.shape_cast %46 : vector<1x1x4x32xf32> to vector<4x32xf32>
    %48 = vector.broadcast %42 : vector<1x32xf32> to vector<4x32xf32>
    %49 = arith.mulf %48, %45 : vector<4x32xf32>
    %50 = arith.addf %35, %49 : vector<4x32xf32>
    %51 = vector.broadcast %43 : vector<1x32xf32> to vector<4x32xf32>
    %52 = arith.mulf %51, %47 : vector<4x32xf32>
    %53 = arith.subf %50, %52 : vector<4x32xf32>
    %54 = vector.broadcast %42 : vector<1x32xf32> to vector<4x32xf32>
    %55 = arith.mulf %54, %47 : vector<4x32xf32>
    %56 = arith.addf %41, %55 : vector<4x32xf32>
    %57 = vector.broadcast %43 : vector<1x32xf32> to vector<4x32xf32>
    %58 = arith.mulf %57, %45 : vector<4x32xf32>
    %59 = arith.addf %56, %58 : vector<4x32xf32>
    %60 = vector.extract_strided_slice %1 {offsets = [3, 0], sizes = [1, 32], strides = [1, 1]} : vector<4x32xf32> to vector<1x32xf32>
    %61 = vector.extract_strided_slice %3 {offsets = [3, 0], sizes = [1, 32], strides = [1, 1]} : vector<4x32xf32> to vector<1x32xf32>
    %c0_30 = arith.constant 0 : index
    %c3 = arith.constant 3 : index
    %c0_31 = arith.constant 0 : index
    %c0_32 = arith.constant 0 : index
    %62 = vector.load %arg2[%c0_30, %c3, %c0_31, %c0_32] : memref<2x4x4x32xf32, #tpu.memory_space<vmem>>, vector<1x1x4x32xf32>
    %63 = vector.shape_cast %62 : vector<1x1x4x32xf32> to vector<4x32xf32>
    %c1_33 = arith.constant 1 : index
    %c3_34 = arith.constant 3 : index
    %c0_35 = arith.constant 0 : index
    %c0_36 = arith.constant 0 : index
    %64 = vector.load %arg2[%c1_33, %c3_34, %c0_35, %c0_36] : memref<2x4x4x32xf32, #tpu.memory_space<vmem>>, vector<1x1x4x32xf32>
    %65 = vector.shape_cast %64 : vector<1x1x4x32xf32> to vector<4x32xf32>
    %66 = vector.broadcast %60 : vector<1x32xf32> to vector<4x32xf32>
    %67 = arith.mulf %66, %63 : vector<4x32xf32>
    %68 = arith.addf %53, %67 : vector<4x32xf32>
    %69 = vector.broadcast %61 : vector<1x32xf32> to vector<4x32xf32>
    %70 = arith.mulf %69, %65 : vector<4x32xf32>
    %71 = arith.subf %68, %70 : vector<4x32xf32>
    %72 = vector.broadcast %60 : vector<1x32xf32> to vector<4x32xf32>
    %73 = arith.mulf %72, %65 : vector<4x32xf32>
    %74 = arith.addf %59, %73 : vector<4x32xf32>
    %75 = vector.broadcast %61 : vector<1x32xf32> to vector<4x32xf32>
    %76 = arith.mulf %75, %63 : vector<4x32xf32>
    %77 = arith.addf %74, %76 : vector<4x32xf32>
    %c0_37 = arith.constant 0 : index
    %c0_38 = arith.constant 0 : index
    %c0_39 = arith.constant 0 : index
    %c0_40 = arith.constant 0 : index
    %78 = vector.load %arg3[%c0_37, %c0_38, %c0_39, %c0_40] : memref<1x2x4x32xf32, #tpu.memory_space<vmem>>, vector<1x1x4x32xf32>
    %79 = vector.shape_cast %78 : vector<1x1x4x32xf32> to vector<4x32xf32>
    %80 = vector.shape_cast %71 : vector<4x32xf32> to vector<1x1x4x32xf32>
    tpu.vector_store %arg3[%c0_37, %c0_38, %c0_39, %c0_40], %80 {strides = array<i32>} : memref<1x2x4x32xf32, #tpu.memory_space<vmem>>, vector<1x1x4x32xf32>,
    %c0_41 = arith.constant 0 : index
    %c1_42 = arith.constant 1 : index
    %c0_43 = arith.constant 0 : index
    %c0_44 = arith.constant 0 : index
    %81 = vector.load %arg3[%c0_41, %c1_42, %c0_43, %c0_44] : memref<1x2x4x32xf32, #tpu.memory_space<vmem>>, vector<1x1x4x32xf32>
    %82 = vector.shape_cast %81 : vector<1x1x4x32xf32> to vector<4x32xf32>
    %83 = vector.shape_cast %77 : vector<4x32xf32> to vector<1x1x4x32xf32>
    tpu.vector_store %arg3[%c0_41, %c1_42, %c0_43, %c0_44], %83 {strides = array<i32>} : memref<1x2x4x32xf32, #tpu.memory_space<vmem>>, vector<1x1x4x32xf32>,
    return
  }
  func.func @transform_0(%arg0: i32) -> (i32, i32, i32, i32) {
    %c0_i32 = arith.constant 0 : i32
    %c0_i32_0 = arith.constant 0 : i32
    %c0_i32_1 = arith.constant 0 : i32
    %c0_i32_2 = arith.constant 0 : i32
    return %arg0, %c0_i32, %c0_i32_0, %c0_i32_1 : i32, i32, i32, i32
  }
  func.func @transform_1(%arg0: i32) -> (i32, i32, i32, i32) {
    %c0_i32 = arith.constant 0 : i32
    %c0_i32_0 = arith.constant 0 : i32
    %c0_i32_1 = arith.constant 0 : i32
    %c0_i32_2 = arith.constant 0 : i32
    %c0_i32_3 = arith.constant 0 : i32
    return %c0_i32, %c0_i32_0, %c0_i32_1, %c0_i32_2 : i32, i32, i32, i32
  }
  func.func @transform_2(%arg0: i32) -> (i32, i32, i32, i32) {
    %c0_i32 = arith.constant 0 : i32
    %c0_i32_0 = arith.constant 0 : i32
    %c0_i32_1 = arith.constant 0 : i32
    %c0_i32_2 = arith.constant 0 : i32
    return %arg0, %c0_i32, %c0_i32_0, %c0_i32_1 : i32, i32, i32, i32
  }
}

</mosaic_0001>

<llo_original>
// kernel: tpu_custom_call.1
$region0: #{tpu_custom_call.1}
  #allocation0 [shape = 'u32[]', space=smem, size = 0x4, offset = 0x4, fixed_abs, tag = 'smem constant byte address 0x4 - core index']
  #allocation1 [shape = 'u32[72,128]{1,0:T(1,128)}', space=vmem, size = 0x9000, scoped, tag = 'internal scratch']
  %s0 = inlined_call_operand.hbm [shape: f32[2,2,4,32], index: 0, kind: input, shape index: {}]
  %s1 = inlined_call_operand.hbm [shape: f32[2,4,4,32], index: 1, kind: input, shape index: {}]
  %s2 = inlined_call_operand.hbm [shape: f32[2,2,4,32], index: 2, kind: output, shape index: {}]
  %s3 = sld [smem:[#allocation0]]
  $region49: #{tpu_custom_call.1} parent=0
    _
  %s5 = ssub.s32 1, %s3
  %s6 = scalar_select 0, %s5, %s3
  $region1: #{tpu_custom_call.1} parent=0
    #allocation2 [shape = 'u8[8192]{0}', space=vmem, size = 0x2000, scoped, tag = 'input window, operand 0']
    #allocation3 [shape = 's32[2]{0}', space=sflag, size = 0x8, scoped, tag = 'scoped memory for tpu_custom_call.1']
    #allocation4 [shape = 's32[2]{0}', space=sflag, size = 0x8, scoped, tag = 'scoped memory for tpu_custom_call.1']
    #allocation5 [shape = 'u8[16384]{0}', space=vmem, size = 0x4000, scoped, tag = 'input window, operand 1, single buffered']
    #allocation6 [shape = 's32[1]{0}', space=sflag, size = 0x4, scoped, tag = 'scoped memory for tpu_custom_call.1']
    #allocation7 [shape = 'u8[8192]{0}', space=vmem, size = 0x2000, scoped, tag = 'output window, operand 0']
    %7 = vsyncpa [#allocation3], 0
    %s8 = scalar_lea.sflag [#allocation3], 1
    %9 = vsyncpa %s8, 0
    %10 = vsyncpa [#allocation6], 0
    %11 = vsyncpa [#allocation4], 0
    %s12 = scalar_lea.sflag [#allocation4], 1
    %13 = vsyncpa %s12, 0
    loop: start=0, step=1, limit=4
    $region2: #{tpu_custom_call.1} parent=1 // loop_pre_header
      _
    $region3: #{tpu_custom_call.1} parent=1 // loop_header
      %s15 = sphi 0, %s19
      %p16 = scmp.ge.s32.totalorder %s15, 4
      %s25 = sphi 0, %s27
      %s28 = sphi 0, %s25
      %s29 = sphi 0, %s28
      %s45 = sphi 0, %s29
      %s49 = sphi 0, %s49
      %s51 = sphi 0, %s49
      %s52 = sphi 0, %s51
      %s66 = sphi 0, %s52
      %s72 = sphi 0, %s74
      %s75 = sphi 0, %s72
      %s76 = sphi 0, %s75
      %s92 = sphi 0, %s76
    $region4: #{tpu_custom_call.1} parent=1 // loop_header_branch
      %18 = sbr.rel (%p16) target = $region8
    $region5: #{tpu_custom_call.1} parent=1 // loop_body
      %s20 = ssub.s32 %s15, 1
      %s21 = ssub.s32 %s15, 2
      %s22 = sadd.s32 %s15, 1
      %s23 = ssub.s32 %s15, %s22
      %p24 = scmp.eq.s32.totalorder %s23, 0
      %s26 = sadd.s32 %s25, 1
      %s27 = scalar_select %p24, %s25, %s26
      %p30 = pneg %p24
      %p31 = scmp.eq.s32.totalorder %s15, 1
      %p32 = por %p30, %p31
      %p33 = scmp.ne.s32.totalorder %s25, %s28
      %p34 = scmp.eq.s32.totalorder %s15, 0
      %p35 = por %p33, %p34
      %p36 = scmp.ne.s32.totalorder %s25, %s28
      %p37 = scmp.eq.s32.totalorder %s20, 1
      %p38 = por %p36, %p37
      %p39 = scmp.ne.s32.totalorder %s28, %s29
      %p40 = scmp.eq.s32.totalorder %s20, 0
      %p41 = por %p39, %p40
      %p42 = scmp.ne.s32.totalorder %s28, %s29
      %p43 = scmp.eq.s32.totalorder %s21, 1
      %p44 = por %p42, %p43
      %p46 = scmp.ne.s32.totalorder %s29, %s45
      %p47 = scmp.eq.s32.totalorder %s21, 0
      %p48 = por %p46, %p47
      %s50 = sadd.s32 %s49, 1
      %p53 = scmp.eq.s32.totalorder %s15, 1
      %p54 = scmp.ne.s32.totalorder %s49, %s51
      %p55 = scmp.eq.s32.totalorder %s15, 0
      %p56 = por %p54, %p55
      %p57 = scmp.ne.s32.totalorder %s49, %s51
      %p58 = scmp.eq.s32.totalorder %s20, 1
      %p59 = por %p57, %p58
      %p60 = scmp.ne.s32.totalorder %s51, %s52
      %p61 = scmp.eq.s32.totalorder %s20, 0
      %p62 = por %p60, %p61
      %p63 = scmp.ne.s32.totalorder %s51, %s52
      %p64 = scmp.eq.s32.totalorder %s21, 1
      %p65 = por %p63, %p64
      %p67 = scmp.ne.s32.totalorder %s52, %s66
      %p68 = scmp.eq.s32.totalorder %s21, 0
      %p69 = por %p67, %p68
      %s70 = ssub.s32 %s15, %s22
      %p71 = scmp.eq.s32.totalorder %s70, 0
      %s73 = sadd.s32 %s72, 1
      %s74 = scalar_select %p71, %s72, %s73
      %p77 = pneg %p71
      %p78 = scmp.eq.s32.totalorder %s15, 1
      %p79 = por %p77, %p78
      %p80 = scmp.ne.s32.totalorder %s72, %s75
      %p81 = scmp.eq.s32.totalorder %s15, 0
      %p82 = por %p80, %p81
      %p83 = scmp.ne.s32.totalorder %s72, %s75
      %p84 = scmp.eq.s32.totalorder %s20, 1
      %p85 = por %p83, %p84
      %p86 = scmp.ne.s32.totalorder %s75, %s76
      %p87 = scmp.eq.s32.totalorder %s20, 0
      %p88 = por %p86, %p87
      %p89 = scmp.ne.s32.totalorder %s75, %s76
      %p90 = scmp.eq.s32.totalorder %s21, 1
      %p91 = por %p89, %p90
      %p93 = scmp.ne.s32.totalorder %s76, %s92
      %p94 = scmp.eq.s32.totalorder %s21, 0
      %p95 = por %p93, %p94
      %p96 = scmp.le.s32.totalorder 1, %s15
      %p97 = scmp.lt.s32.totalorder %s15, 3
      %p98 = pnand %p96, %p97
      %p99 = pneg %p98
      // Predicated region
      $region9: #{tpu_custom_call.1} parent=5 // pred_check
        _
      $region10: #{tpu_custom_call.1} parent=5 // pred_check_branch
        %101 = sbr.rel (%p98) target = $region12
      $region11: #{tpu_custom_call.1} parent=5 // pred_region
        %s102 = ssub.s32 %s15, 1
        // Predicated region
        $region13: #{tpu_custom_call.1} parent=11 // pred_check
          %p103 = pneg %p62
        $region14: #{tpu_custom_call.1} parent=11 // pred_check_branch
          %105 = sbr.rel (%p103) target = $region16
        $region15: #{tpu_custom_call.1} parent=11 // pred_region
          %107 = vsyncadd [#allocation6], 0
          %s108 = sshll.u32 %s1, 4
          %s109 = int_to_ptr.hbm [resolvable:$true] %s108
          %s110 = sshll.u32 [#allocation5], 4
          %s111 = int_to_ptr.vmem [resolvable:$true] %s110
          %116 = dma.hbm_to_vmem [thread:$0]  %s109, 512, %s111, [#allocation6], 64, 64, 4
        $region16: #{tpu_custom_call.1} parent=11 // pred_fallthru
          _
      $region12: #{tpu_custom_call.1} parent=5 // pred_fallthru
        _
      %p117 = scmp.lt.s32.totalorder %s15, 2
      // Predicated region
      $region17: #{tpu_custom_call.1} parent=5 // pred_check
        %p118 = pneg %p117
      $region18: #{tpu_custom_call.1} parent=5 // pred_check_branch
        %120 = sbr.rel (%p118) target = $region20
      $region19: #{tpu_custom_call.1} parent=5 // pred_region
        // Predicated region
        $region21: #{tpu_custom_call.1} parent=19 // pred_check
          %p121 = pneg %p35
        $region22: #{tpu_custom_call.1} parent=19 // pred_check_branch
          %123 = sbr.rel (%p121) target = $region24
        $region23: #{tpu_custom_call.1} parent=19 // pred_region
          %s124 = sand.u32 %s25, 1
          %s125 = scalar_lea.sflag [#allocation3], %s124
          %s126 = sand.u32 %s25, 1
          %s127 = smul.addr %s126, 8
          %s128 = scalar_lea.vmem [#allocation2], %s127
          %130 = vsyncadd %s125, 0
          %s131 = smul.addr %s15, 2
          %s132 = smul.addr %s131, 4
          %s133 = scalar_lea.hbm %s0, %s132
          %s134 = sshll.u32 %s133, 4
          %s135 = int_to_ptr.hbm [resolvable:$true] %s134
          %s136 = sshll.u32 %s128, 4
          %s137 = int_to_ptr.vmem [resolvable:$true] %s136
          %142 = dma.hbm_to_vmem [thread:$0]  %s135, 128, %s137, %s125, 64, 64, 4
        $region24: #{tpu_custom_call.1} parent=19 // pred_fallthru
          _
      $region20: #{tpu_custom_call.1} parent=5 // pred_fallthru
        _
      %p143 = scmp.le.s32.totalorder 1, %s15
      %p144 = scmp.lt.s32.totalorder %s15, 3
      %p145 = pnand %p143, %p144
      %p146 = pneg %p145
      // Predicated region
      $region25: #{tpu_custom_call.1} parent=5 // pred_check
        _
      $region26: #{tpu_custom_call.1} parent=5 // pred_check_branch
        %148 = sbr.rel (%p145) target = $region28
      $region27: #{tpu_custom_call.1} parent=5 // pred_region
        %s149 = ssub.s32 %s15, 1
        %s150 = sand.u32 %s28, 1
        %s151 = scalar_lea.sflag [#allocation3], %s150
        %s152 = sand.u32 %s28, 1
        %s153 = smul.addr %s152, 8
        %s154 = scalar_lea.vmem [#allocation2], %s153
        // Predicated region
        $region29: #{tpu_custom_call.1} parent=27 // pred_check
          %p155 = pneg %p41
        $region30: #{tpu_custom_call.1} parent=27 // pred_check_branch
          %157 = sbr.rel (%p155) target = $region32
        $region31: #{tpu_custom_call.1} parent=27 // pred_region
          %159 = dma.done %s151, 128
        $region32: #{tpu_custom_call.1} parent=27 // pred_fallthru
          _
        // Predicated region
        $region33: #{tpu_custom_call.1} parent=27 // pred_check
          %p160 = pneg %p62
        $region34: #{tpu_custom_call.1} parent=27 // pred_check_branch
          %162 = sbr.rel (%p160) target = $region36
        $region35: #{tpu_custom_call.1} parent=27 // pred_region
          %164 = dma.done [#allocation6], 512
        $region36: #{tpu_custom_call.1} parent=27 // pred_fallthru
          _
        %s165 = sand.u32 %s28, 1
        %s166 = scalar_lea.sflag [#allocation3], %s165
        %s167 = sand.u32 %s28, 1
        %s168 = smul.addr %s167, 8
        %s169 = scalar_lea.vmem [#allocation2], %s168
        %p170 = pneg %p41
        %p171 = pneg %p38
        %p172 = pneg %p62
        %p173 = pneg %p59
        %p174 = pneg %p88
        %p175 = pneg %p85
        %s176 = sand.u32 %s75, 1
        %s177 = scalar_lea.sflag [#allocation4], %s176
        %s178 = sand.u32 %s75, 1
        %s179 = smul.addr %s178, 8
        %s180 = scalar_lea.vmem [#allocation7], %s179
        %v181 = vld [vmem:[%s154] sm:$0xf]
        %s182 = scalar_lea.vmem %s154, 4 [#allocation2]
        %v183 = vld [vmem:[%s182] sm:$0xf]
        %v184 = vld [vmem:[#allocation5] sm:$0xf]
        %s185 = scalar_lea.vmem [#allocation5], 16
        %v186 = vld [vmem:[%s185] sm:$0xf]
        %v187 = vperm.slane %v181, 0
        %v188 = vmul.f32 %v187, %v184
        %v189 = vadd.f32 %v188, 0.0
        %v190 = vperm.slane %v183, 0
        %v191 = vmul.f32 %v190, %v186
        %v192 = vsub.f32 %v189, %v191
        %v193 = vmul.f32 %v187, %v186
        %v194 = vadd.f32 %v193, 0.0
        %v195 = vmul.f32 %v190, %v184
        %v196 = vadd.f32 %v194, %v195
        %s197 = scalar_lea.vmem [#allocation5], 4
        %v198 = vld [vmem:[%s197] sm:$0xf]
        %s199 = scalar_lea.vmem [#allocation5], 20
        %v200 = vld [vmem:[%s199] sm:$0xf]
        %v201 = vperm.slane %v181, 1
        %v202 = vmul.f32 %v201, %v198
        %v203 = vadd.f32 %v192, %v202
        %v204 = vperm.slane %v183, 1
        %v205 = vmul.f32 %v204, %v200
        %v206 = vsub.f32 %v203, %v205
        %v207 = vmul.f32 %v201, %v200
        %v208 = vadd.f32 %v196, %v207
        %v209 = vmul.f32 %v204, %v198
        %v210 = vadd.f32 %v208, %v209
        %s211 = scalar_lea.vmem [#allocation5], 8
        %v212 = vld [vmem:[%s211] sm:$0xf]
        %s213 = scalar_lea.vmem [#allocation5], 24
        %v214 = vld [vmem:[%s213] sm:$0xf]
        %v215 = vperm.slane %v181, 2
        %v216 = vmul.f32 %v215, %v212
        %v217 = vadd.f32 %v206, %v216
        %v218 = vperm.slane %v183, 2
        %v219 = vmul.f32 %v218, %v214
        %v220 = vsub.f32 %v217, %v219
        %v221 = vmul.f32 %v215, %v214
        %v222 = vadd.f32 %v210, %v221
        %v223 = vmul.f32 %v218, %v212
        %v224 = vadd.f32 %v222, %v223
        %s225 = scalar_lea.vmem [#allocation5], 12
        %v226 = vld [vmem:[%s225] sm:$0xf]
        %s227 = scalar_lea.vmem [#allocation5], 28
        %v228 = vld [vmem:[%s227] sm:$0xf]
        %v229 = vperm.slane %v181, 3
        %v230 = vmul.f32 %v229, %v226
        %v231 = vadd.f32 %v220, %v230
        %v232 = vperm.slane %v183, 3
        %v233 = vmul.f32 %v232, %v228
        %v234 = vsub.f32 %v231, %v233
        %v235 = vmul.f32 %v229, %v228
        %v236 = vadd.f32 %v224, %v235
        %v237 = vmul.f32 %v232, %v226
        %v238 = vadd.f32 %v236, %v237
        %vm239 = vcmask 257024
        %240 = vst.msk [vmem:[%s180] sm:$0xf] %vm239, %v234
        %s241 = scalar_lea.vmem %s180, 4 [#allocation7]
        %242 = vst.msk [vmem:[%s241] sm:$0xf] %vm239, %v238
        %s243 = sand.u32 %s75, 1
        %s244 = scalar_lea.sflag [#allocation4], %s243
        %s245 = sand.u32 %s75, 1
        %s246 = smul.addr %s245, 8
        %s247 = scalar_lea.vmem [#allocation7], %s246
        // Predicated region
        $region37: #{tpu_custom_call.1} parent=27 // pred_check
          %p248 = pneg %p85
        $region38: #{tpu_custom_call.1} parent=27 // pred_check_branch
          %250 = sbr.rel (%p248) target = $region40
        $region39: #{tpu_custom_call.1} parent=27 // pred_region
          %252 = vsyncadd %s244, 0
          %s253 = smul.addr %s20, 2
          %s254 = smul.addr %s253, 4
          %s255 = scalar_lea.hbm %s2, %s254
          %s256 = sshll.u32 %s247, 4
          %s257 = int_to_ptr.vmem [resolvable:$true] %s256
          %s258 = sshll.u32 %s255, 4
          %s259 = int_to_ptr.hbm [resolvable:$true] %s258
          %264 = dma.vmem_to_hbm [thread:$0]  %s257, 128, %s259, %s244, 64, 64, 4
        $region40: #{tpu_custom_call.1} parent=27 // pred_fallthru
          _
      $region28: #{tpu_custom_call.1} parent=5 // pred_fallthru
        _
      %p265 = scmp.le.s32.totalorder 2, %s15
      // Predicated region
      $region41: #{tpu_custom_call.1} parent=5 // pred_check
        %p266 = pneg %p265
      $region42: #{tpu_custom_call.1} parent=5 // pred_check_branch
        %268 = sbr.rel (%p266) target = $region44
      $region43: #{tpu_custom_call.1} parent=5 // pred_region
        %s269 = ssub.s32 %s15, 2
        // Predicated region
        $region45: #{tpu_custom_call.1} parent=43 // pred_check
          %p270 = pneg %p91
        $region46: #{tpu_custom_call.1} parent=43 // pred_check_branch
          %272 = sbr.rel (%p270) target = $region48
        $region47: #{tpu_custom_call.1} parent=43 // pred_region
          %s273 = sand.u32 %s76, 1
          %s274 = scalar_lea.sflag [#allocation4], %s273
          %s275 = sand.u32 %s76, 1
          %s276 = smul.addr %s275, 8
          %s277 = scalar_lea.vmem [#allocation7], %s276
          %279 = dma.done %s274, 128
        $region48: #{tpu_custom_call.1} parent=43 // pred_fallthru
          _
      $region44: #{tpu_custom_call.1} parent=5 // pred_fallthru
        _
    $region6: #{tpu_custom_call.1} parent=1 // loop_footer
      %s19 = sadd.s32 1, %s15
    $region7: #{tpu_custom_call.1} parent=1 // loop_footer_branch
      %14 = sbr.rel target = $region3
    $region8: #{tpu_custom_call.1} parent=1 // loop_exit
      _
    %280 = vsyncpa [#allocation3], 1
    %s281 = scalar_lea.sflag [#allocation3], 1
    %282 = vsyncpa %s281, 1
    %283 = vsyncpa [#allocation6], 1
    %284 = vsyncpa [#allocation4], 1
    %s285 = scalar_lea.sflag [#allocation4], 1
    %286 = vsyncpa %s285, 1

</llo_original>
